<compile_context>
chip_gen: v7x
topology: tpu7x:2x2x1
jax: 0.10.0
libtpu: 0.0.40
codegen_flags: <defaults>
</compile_context>

<pallas_src>
import functools
import math

import jax
import jax.numpy as jnp
from jax import lax
from jax.experimental import pallas as pl
from jax.experimental.pallas import tpu as pltpu


_SEQ_LEN = 8          # forced by Linear(channels3) directly after Flatten()
_IN_CH = 7
_MAX_BLOCK = 1024     # samples per grid block (GEMM M; multiple of 256)
_BN_EPS = 1e-5


# ---------------------------------------------------------------------------
# In-kernel helpers (operate on values, not refs)
# ---------------------------------------------------------------------------
def _gelu(x):
    # tanh-approximate GELU: runs on the EUP slot instead of a long VPU erf
    # polynomial.  |delta| vs nn.GELU's exact-erf default is < ~3e-3.
    c = 0.7978845608028654  # sqrt(2/pi)
    return 0.5 * x * (1.0 + jnp.tanh(c * (x + 0.044715 * x * x * x)))


def _maxpool_lanes(y, length, channels):
    """MaxPool1d(2) on a (B, length*channels) activation whose lane layout is
    position-major, channel-minor (column = pos*channels + ch)."""
    c = channels
    halves = [jnp.maximum(y[:, (2 * k) * c:(2 * k + 1) * c],
                          y[:, (2 * k + 1) * c:(2 * k + 2) * c])
              for k in range(length // 2)]
    return halves[0] if len(halves) == 1 else jnp.concatenate(halves, axis=1)


def _bn_eval(y, g, b, rm, rv):
    """Eval-mode BatchNorm1d as a per-lane affine; g/b/rm/rv are pre-tiled (1, L*C)."""
    scale = g * lax.rsqrt(rv + _BN_EPS)
    return y * scale + (b - rm * scale)


# ---------------------------------------------------------------------------
# Fused whole-network kernel (one batch block per grid step)
# ---------------------------------------------------------------------------
def summary_net_1dps_kernel(x_ref,
                            w1_ref, b1_ref, g1_ref, bt1_ref, rm1_ref, rv1_ref,
                            w2_ref, b2_ref,
                            w3_ref, b3_ref, g3_ref, bt3_ref, rm3_ref, rv3_ref,
                            fw1_ref, fb1_ref, fw2_ref, fb2_ref, fw3_ref, fb3_ref,
                            o_ref):
    x = x_ref[...]                                             # (B, 56) f32

    def gemm(a, w_ref, b_ref):
        # bf16 operands (native MXU rate), f32 accumulation.
        return jnp.dot(a.astype(jnp.bfloat16), w_ref[...],
                       preferred_element_type=jnp.float32) + b_ref[...]

    # conv1 block: Conv1d(7,16,3,p=1) + BN(eval) + GELU + MaxPool1d(2); Dropout1d -> id
    y = gemm(x, w1_ref, b1_ref)                                # (B, 8*16)
    y = _gelu(_bn_eval(y, g1_ref[...], bt1_ref[...], rm1_ref[...], rv1_ref[...]))
    y = _maxpool_lanes(y, 8, 16)                               # (B, 4*16)

    # conv2 block: Conv1d(16,32,3,p=1) + GELU + MaxPool1d(2)
    y = gemm(y, w2_ref, b2_ref)                                # (B, 4*32)
    y = _gelu(y)
    y = _maxpool_lanes(y, 4, 32)                               # (B, 2*32)

    # conv3 block: Conv1d(32,42,3,p=1) + BN(eval) + GELU + MaxPool1d(2)
    y = gemm(y, w3_ref, b3_ref)                                # (B, 2*42)
    y = _gelu(_bn_eval(y, g3_ref[...], bt3_ref[...], rm3_ref[...], rv3_ref[...]))
    y = _maxpool_lanes(y, 2, 42)                               # (B, 42) == Flatten()

    # MLP head: Linear(42,42) -> Dropout(id) -> GELU -> Linear(42,32) -> GELU
    #           -> Linear(32,F) -> Tanh
    h = _gelu(gemm(y, fw1_ref, fb1_ref))
    h = _gelu(gemm(h, fw2_ref, fb2_ref))
    o_ref[...] = jnp.tanh(gemm(h, fw3_ref, fb3_ref))


# ---------------------------------------------------------------------------
# Wrapper: batch grid, constant-index weights, parallel semantics
# ---------------------------------------------------------------------------
_KPARAM_ORDER = ("w1", "b1", "g1", "bt1", "rm1", "rv1",
                 "w2", "b2",
                 "w3", "b3", "g3", "bt3", "rm3", "rv3",
                 "fw1", "fb1", "fw2", "fb2", "fw3", "fb3")


def _pick_block(n):
    """Largest multiple-of-8 divisor of n up to _MAX_BLOCK (whole batch if none)."""
    if n <= _MAX_BLOCK:
        return n
    start = _MAX_BLOCK - _MAX_BLOCK % 8
    for b in range(start, 7, -8):
        if n % b == 0:
            return b
    return n


@functools.partial(jax.jit, static_argnames=("block",))
def forward(x, kparams, block=None):
    """x: (N, 7, 8) float32 in the PyTorch NCL layout; kparams from prepare_kernel_params."""
    n, c_in, length = x.shape
    assert (c_in, length) == (_IN_CH, _SEQ_LEN), (
        "Linear(42) after Flatten() requires input shape (N, 7, 8)")
    num_features = kparams["fb3"].shape[1]

    bn = _pick_block(n) if block is None else block
    assert n % bn == 0 and (bn % 8 == 0 or bn == n)

    # Free layout change (no HBM transpose): (N, 7, 8) -> (N, 56).  The channel-major
    # column order is folded into the dense conv1 matrix.
    x_flat = x.astype(jnp.float32).reshape(n, c_in * length)

    weights = tuple(kparams[k] for k in _KPARAM_ORDER)
    in_specs = ([pl.BlockSpec((bn, c_in * length), lambda i: (i, 0))] +
                [pl.BlockSpec(w.shape, lambda i: (0, 0)) for w in weights])

    return pl.pallas_call(
        summary_net_1dps_kernel,
        grid=(n // bn,),
        in_specs=in_specs,
        out_specs=pl.BlockSpec((bn, num_features), lambda i: (i, 0)),
        out_shape=jax.ShapeDtypeStruct((n, num_features), jnp.float32),
        compiler_params=pltpu.CompilerParams(
            dimension_semantics=("parallel",),        # v7x: shard blocks over 2 TCs
            vmem_limit_bytes=32 * 1024 * 1024),       # sized for v7x's smaller VMEM
    )(x_flat, *weights)


# ---------------------------------------------------------------------------
# Parameters: PyTorch layout + one-time conversion to the kernel's GEMM layout
# ---------------------------------------------------------------------------
def _uniform(key, shape, bound):
    return jax.random.uniform(key, shape, jnp.float32, -bound, bound)


def init_params(key, num_features=6, channels1=16, channels2=32,
                channels3=42, hidden_dim1=42):
    """PyTorch-layout parameters (Conv1d / BatchNorm1d buffers / Linear)."""
    ks = iter(jax.random.split(key, 24))
    p = {}

    def conv(name, c_out, c_in, k=3):
        bound = 1.0 / math.sqrt(c_in * k)
        p[f"{name}_w"] = _uniform(next(ks), (c_out, c_in, k), bound)
        p[f"{name}_b"] = _uniform(next(ks), (c_out,), bound)

    def bn(name, c):
        # Non-default affine/running values so the eval-mode BN path is exercised.
        p[f"{name}_g"] = 1.0 + 0.2 * jax.random.normal(next(ks), (c,), jnp.float32)
        p[f"{name}_b"] = 0.1 * jax.random.normal(next(ks), (c,), jnp.float32)
        p[f"{name}_rm"] = 0.2 * jax.random.normal(next(ks), (c,), jnp.float32)
        p[f"{name}_rv"] = jax.random.uniform(next(ks), (c,), jnp.float32, 0.5, 1.5)

    def linear(name, c_out, c_in):
        bound = 1.0 / math.sqrt(c_in)
        p[f"{name}_w"] = _uniform(next(ks), (c_out, c_in), bound)
        p[f"{name}_b"] = _uniform(next(ks), (c_out,), bound)

    conv("conv1", channels1, _IN_CH); bn("bn1", channels1)
    conv("conv2", channels2, channels1)
    conv("conv3", channels3, channels2); bn("bn3", channels3)
    linear("fc1", hidden_dim1, channels3)
    linear("fc2", 32, hidden_dim1)
    linear("fc3", num_features, 32)
    return p


def _conv_as_dense(w, length, in_channel_major):
    """Fold Conv1d(kernel=3, padding=1) over a fixed `length` into a dense matrix.

    Input  column index: c_in*length + l_in   (channel-major, NCL flatten) if
                         in_channel_major else l_in*C_in + c_in (position-major).
    Output column index: l_out*C_out + c_out  (position-major, channel-minor).
    """
    c_out, c_in, k = w.shape
    big = jnp.zeros((length * c_in, length * c_out), jnp.float32)
    ci = jnp.arange(c_in)
    co = jnp.arange(c_out)
    for l_out in range(length):
        for t in range(k):
            l_in = l_out + t - 1                      # padding = 1
            if not 0 <= l_in < length:                # zero padding -> drop term
                continue
            rows = ci * length + l_in if in_channel_major else l_in * c_in + ci
            cols = l_out * c_out + co
            big = big.at[rows[:, None], cols[None, :]].set(w[:, :, t].T)
    return big


def prepare_kernel_params(p):
    """One-time conversion of PyTorch-layout params into the kernel's GEMM / per-lane
    layout (dense per-stage conv matrices in bf16, pre-tiled bias/BN vectors in f32)."""
    def tile(v, reps):
        return jnp.tile(v.reshape(1, -1).astype(jnp.float32), (1, reps))

    return {
        # conv1 folded over length 8; input columns are channel-major (NCL flatten)
        "w1": _conv_as_dense(p["conv1_w"], 8, True).astype(jnp.bfloat16),
        "b1": tile(p["conv1_b"], 8),
        "g1": tile(p["bn1_g"], 8), "bt1": tile(p["bn1_b"], 8),
        "rm1": tile(p["bn1_rm"], 8), "rv1": tile(p["bn1_rv"], 8),
        # conv2 over length 4 (after pool1); position-major input columns
        "w2": _conv_as_dense(p["conv2_w"], 4, False).astype(jnp.bfloat16),
        "b2": tile(p["conv2_b"], 4),
        # conv3 over length 2 (after pool2)
        "w3": _conv_as_dense(p["conv3_w"], 2, False).astype(jnp.bfloat16),
        "b3": tile(p["conv3_b"], 2),
        "g3": tile(p["bn3_g"], 2), "bt3": tile(p["bn3_b"], 2),
        "rm3": tile(p["bn3_rm"], 2), "rv3": tile(p["bn3_rv"], 2),
        # MLP head: (in, out) GEMM layout
        "fw1": p["fc1_w"].T.astype(jnp.bfloat16), "fb1": p["fc1_b"].reshape(1, -1),
        "fw2": p["fc2_w"].T.astype(jnp.bfloat16), "fb2": p["fc2_b"].reshape(1, -1),
        "fw3": p["fc3_w"].T.astype(jnp.bfloat16), "fb3": p["fc3_b"].reshape(1, -1),
    }


# ---------------------------------------------------------------------------
# Plain-JAX reference (f32, exact-erf GELU, eval-mode BN) for correctness check
# ---------------------------------------------------------------------------
def reference_forward(x, p):
    def conv1d(y, w, b):                               # y: (N, C_in, L)
        out = lax.conv_general_dilated(y, w, window_strides=(1,), padding=((1, 1),),
                                       dimension_numbers=("NCH", "OIH", "NCH"))
        return out + b[None, :, None]

    def bn(y, g, b, rm, rv):
        inv = 1.0 / jnp.sqrt(rv + _BN_EPS)
        return (y - rm[None, :, None]) * inv[None, :, None] * g[None, :, None] \
            + b[None, :, None]

    def gelu(y):                                       # exact erf (PyTorch default)
        return 0.5 * y * (1.0 + lax.erf(y * 0.7071067811865476))

    def pool(y):                                       # MaxPool1d(2)
        n, c, l = y.shape
        return jnp.max(y.reshape(n, c, l // 2, 2), axis=3)

    y = x.astype(jnp.float32)
    y = pool(gelu(bn(conv1d(y, p["conv1_w"], p["conv1_b"]),
                     p["bn1_g"], p["bn1_b"], p["bn1_rm"], p["bn1_rv"])))
    y = pool(gelu(conv1d(y, p["conv2_w"], p["conv2_b"])))
    y = pool(gelu(bn(conv1d(y, p["conv3_w"], p["conv3_b"]),
                     p["bn3_g"], p["bn3_b"], p["bn3_rm"], p["bn3_rv"])))
    h = y.reshape(y.shape[0], -1)                      # Flatten -> (N, 42)
    h = gelu(h @ p["fc1_w"].T + p["fc1_b"])
    h = gelu(h @ p["fc2_w"].T + p["fc2_b"])
    return jnp.tanh(h @ p["fc3_w"].T + p["fc3_b"])


if __name__ == "__main__":
    num_features = 6
    key = jax.random.PRNGKey(0)
    k_params, k_x1, k_x2 = jax.random.split(key, 3)

    params = init_params(k_params, num_features=num_features)
    kparams = prepare_kernel_params(params)

    # Smallest valid input: (N, 7, 8) — three MaxPool1d(2) reduce length 8 -> 1, so
    # Flatten() yields exactly channels3 = 42 features for Linear(42, ...).
    x = jax.random.normal(k_x1, (2, _IN_CH, _SEQ_LEN), jnp.float32)
    out = jax.block_until_ready(forward(x, kparams))
    assert out.shape == (2, num_features), out.shape
    assert bool(jnp.all(jnp.isfinite(out)))

    ref = reference_forward(x, params)
    err = float(jnp.max(jnp.abs(out - ref)))
    # Kernel uses bf16 GEMM operands + tanh-GELU; reference is f32 + exact erf.
    assert err < 7.5e-2, f"max abs err vs f32 reference: {err}"

    # Exercise the batch grid: blocked (grid=4) vs single-block results must agree.
    xb = jax.random.normal(k_x2, (1024, _IN_CH, _SEQ_LEN), jnp.float32)
    out_blocked = jax.block_until_ready(forward(xb, kparams, block=256))
    out_single = jax.block_until_ready(forward(xb, kparams, block=1024))
    assert bool(jnp.all(jnp.isfinite(out_blocked)))
    assert bool(jnp.allclose(out_blocked, out_single, atol=1e-5, rtol=1e-5))

    print("KERNEL_OK")
</pallas_src>

<mosaic_0001>
module attributes {stable_mosaic.version = 11 : i64} {
  func.func @summary_net_1dps_kernel(%arg0: i32, %arg1: memref<2x56xf32, #tpu.memory_space<vmem>>, %arg2: memref<56x128xbf16, #tpu.memory_space<vmem>>, %arg3: memref<1x128xf32, #tpu.memory_space<vmem>>, %arg4: memref<1x128xf32, #tpu.memory_space<vmem>>, %arg5: memref<1x128xf32, #tpu.memory_space<vmem>>, %arg6: memref<1x128xf32, #tpu.memory_space<vmem>>, %arg7: memref<1x128xf32, #tpu.memory_space<vmem>>, %arg8: memref<64x128xbf16, #tpu.memory_space<vmem>>, %arg9: memref<1x128xf32, #tpu.memory_space<vmem>>, %arg10: memref<64x84xbf16, #tpu.memory_space<vmem>>, %arg11: memref<1x84xf32, #tpu.memory_space<vmem>>, %arg12: memref<1x84xf32, #tpu.memory_space<vmem>>, %arg13: memref<1x84xf32, #tpu.memory_space<vmem>>, %arg14: memref<1x84xf32, #tpu.memory_space<vmem>>, %arg15: memref<1x84xf32, #tpu.memory_space<vmem>>, %arg16: memref<42x42xbf16, #tpu.memory_space<vmem>>, %arg17: memref<1x42xf32, #tpu.memory_space<vmem>>, %arg18: memref<42x32xbf16, #tpu.memory_space<vmem>>, %arg19: memref<1x32xf32, #tpu.memory_space<vmem>>, %arg20: memref<32x6xbf16, #tpu.memory_space<vmem>>, %arg21: memref<1x6xf32, #tpu.memory_space<vmem>>, %arg22: memref<2x6xf32, #tpu.memory_space<vmem>>) attributes {dimension_semantics = [#tpu.dimension_semantics<parallel>], iteration_bounds = array<i64: 1>, scalar_prefetch = 0 : i64, scratch_operands = 0 : i64, tpu.core_type = #tpu.core_type<tc>, window_params = [{transform_indices = @transform_0, window_bounds = array<i64: 2, 56>}, {pipeline_mode = #tpu.pipeline_mode<synchronous>, transform_indices = @transform_1, window_bounds = array<i64: 56, 128>}, {pipeline_mode = #tpu.pipeline_mode<synchronous>, transform_indices = @transform_2, window_bounds = array<i64: 1, 128>}, {pipeline_mode = #tpu.pipeline_mode<synchronous>, transform_indices = @transform_3, window_bounds = array<i64: 1, 128>}, {pipeline_mode = #tpu.pipeline_mode<synchronous>, transform_indices = @transform_4, window_bounds = array<i64: 1, 128>}, {pipeline_mode = #tpu.pipeline_mode<synchronous>, transform_indices = @transform_5, window_bounds = array<i64: 1, 128>}, {pipeline_mode = #tpu.pipeline_mode<synchronous>, transform_indices = @transform_6, window_bounds = array<i64: 1, 128>}, {pipeline_mode = #tpu.pipeline_mode<synchronous>, transform_indices = @transform_7, window_bounds = array<i64: 64, 128>}, {pipeline_mode = #tpu.pipeline_mode<synchronous>, transform_indices = @transform_8, window_bounds = array<i64: 1, 128>}, {pipeline_mode = #tpu.pipeline_mode<synchronous>, transform_indices = @transform_9, window_bounds = array<i64: 64, 84>}, {pipeline_mode = #tpu.pipeline_mode<synchronous>, transform_indices = @transform_10, window_bounds = array<i64: 1, 84>}, {pipeline_mode = #tpu.pipeline_mode<synchronous>, transform_indices = @transform_11, window_bounds = array<i64: 1, 84>}, {pipeline_mode = #tpu.pipeline_mode<synchronous>, transform_indices = @transform_12, window_bounds = array<i64: 1, 84>}, {pipeline_mode = #tpu.pipeline_mode<synchronous>, transform_indices = @transform_13, window_bounds = array<i64: 1, 84>}, {pipeline_mode = #tpu.pipeline_mode<synchronous>, transform_indices = @transform_14, window_bounds = array<i64: 1, 84>}, {pipeline_mode = #tpu.pipeline_mode<synchronous>, transform_indices = @transform_15, window_bounds = array<i64: 42, 42>}, {pipeline_mode = #tpu.pipeline_mode<synchronous>, transform_indices = @transform_16, window_bounds = array<i64: 1, 42>}, {pipeline_mode = #tpu.pipeline_mode<synchronous>, transform_indices = @transform_17, window_bounds = array<i64: 42, 32>}, {pipeline_mode = #tpu.pipeline_mode<synchronous>, transform_indices = @transform_18, window_bounds = array<i64: 1, 32>}, {pipeline_mode = #tpu.pipeline_mode<synchronous>, transform_indices = @transform_19, window_bounds = array<i64: 32, 6>}, {pipeline_mode = #tpu.pipeline_mode<synchronous>, transform_indices = @transform_20, window_bounds = array<i64: 1, 6>}, {transform_indices = @transform_21, window_bounds = array<i64: 2, 6>}]} {
    %c0 = arith.constant 0 : index
    %c0_0 = arith.constant 0 : index
    %0 = vector.load %arg1[%c0, %c0_0] : memref<2x56xf32, #tpu.memory_space<vmem>>, vector<2x56xf32>
    %1 = arith.truncf %0 : vector<2x56xf32> to vector<2x56xbf16>
    %c0_1 = arith.constant 0 : index
    %c0_2 = arith.constant 0 : index
    %2 = vector.load %arg2[%c0_1, %c0_2] : memref<56x128xbf16, #tpu.memory_space<vmem>>, vector<56x128xbf16>
    %cst = arith.constant dense<0.000000e+00> : vector<2x128xf32>
    %3 = tpu.matmul %1, %2, %cst {dimension_numbers = #tpu.dot_dimension_numbers<[1], [0], [0], [1], [0, 0, 1, 1], [], []>} : vector<2x56xbf16>, vector<56x128xbf16>, vector<2x128xf32> -> vector<2x128xf32>
    %c0_3 = arith.constant 0 : index
    %c0_4 = arith.constant 0 : index
    %4 = vector.load %arg3[%c0_3, %c0_4] : memref<1x128xf32, #tpu.memory_space<vmem>>, vector<1x128xf32>
    %5 = vector.broadcast %4 : vector<1x128xf32> to vector<2x128xf32>
    %6 = arith.addf %3, %5 : vector<2x128xf32>
    %c0_5 = arith.constant 0 : index
    %c0_6 = arith.constant 0 : index
    %7 = vector.load %arg4[%c0_5, %c0_6] : memref<1x128xf32, #tpu.memory_space<vmem>>, vector<1x128xf32>
    %c0_7 = arith.constant 0 : index
    %c0_8 = arith.constant 0 : index
    %8 = vector.load %arg5[%c0_7, %c0_8] : memref<1x128xf32, #tpu.memory_space<vmem>>, vector<1x128xf32>
    %c0_9 = arith.constant 0 : index
    %c0_10 = arith.constant 0 : index
    %9 = vector.load %arg6[%c0_9, %c0_10] : memref<1x128xf32, #tpu.memory_space<vmem>>, vector<1x128xf32>
    %c0_11 = arith.constant 0 : index
    %c0_12 = arith.constant 0 : index
    %10 = vector.load %arg7[%c0_11, %c0_12] : memref<1x128xf32, #tpu.memory_space<vmem>>, vector<1x128xf32>
    %cst_13 = arith.constant 9.99999974E-6 : f32
    %11 = vector.broadcast %cst_13 : f32 to vector<1x128xf32>
    %12 = arith.addf %10, %11 : vector<1x128xf32>
    %13 = math.rsqrt %12 : vector<1x128xf32>
    %14 = arith.mulf %7, %13 : vector<1x128xf32>
    %15 = vector.broadcast %14 : vector<1x128xf32> to vector<2x128xf32>
    %16 = arith.mulf %6, %15 : vector<2x128xf32>
    %17 = arith.mulf %9, %14 : vector<1x128xf32>
    %18 = arith.subf %8, %17 : vector<1x128xf32>
    %19 = vector.broadcast %18 : vector<1x128xf32> to vector<2x128xf32>
    %20 = arith.addf %16, %19 : vector<2x128xf32>
    %cst_14 = arith.constant 5.000000e-01 : f32
    %21 = vector.broadcast %cst_14 : f32 to vector<2x128xf32>
    %22 = arith.mulf %21, %20 : vector<2x128xf32>
    %cst_15 = arith.constant 4.471500e-02 : f32
    %23 = vector.broadcast %cst_15 : f32 to vector<2x128xf32>
    %24 = arith.mulf %23, %20 : vector<2x128xf32>
    %25 = arith.mulf %24, %20 : vector<2x128xf32>
    %26 = arith.mulf %25, %20 : vector<2x128xf32>
    %27 = arith.addf %20, %26 : vector<2x128xf32>
    %cst_16 = arith.constant 0.797884583 : f32
    %28 = vector.broadcast %cst_16 : f32 to vector<2x128xf32>
    %29 = arith.mulf %28, %27 : vector<2x128xf32>
    %30 = math.tanh %29 : vector<2x128xf32>
    %cst_17 = arith.constant 1.000000e+00 : f32
    %31 = vector.broadcast %cst_17 : f32 to vector<2x128xf32>
    %32 = arith.addf %31, %30 : vector<2x128xf32>
    %33 = arith.mulf %22, %32 : vector<2x128xf32>
    %34 = vector.extract_strided_slice %33 {offsets = [0, 0], sizes = [2, 16], strides = [1, 1]} : vector<2x128xf32> to vector<2x16xf32>
    %35 = vector.extract_strided_slice %33 {offsets = [0, 16], sizes = [2, 16], strides = [1, 1]} : vector<2x128xf32> to vector<2x16xf32>
    %36 = arith.maximumf %34, %35 : vector<2x16xf32>
    %37 = vector.extract_strided_slice %33 {offsets = [0, 32], sizes = [2, 16], strides = [1, 1]} : vector<2x128xf32> to vector<2x16xf32>
    %38 = vector.extract_strided_slice %33 {offsets = [0, 48], sizes = [2, 16], strides = [1, 1]} : vector<2x128xf32> to vector<2x16xf32>
    %39 = arith.maximumf %37, %38 : vector<2x16xf32>
    %40 = vector.extract_strided_slice %33 {offsets = [0, 64], sizes = [2, 16], strides = [1, 1]} : vector<2x128xf32> to vector<2x16xf32>
    %41 = vector.extract_strided_slice %33 {offsets = [0, 80], sizes = [2, 16], strides = [1, 1]} : vector<2x128xf32> to vector<2x16xf32>
    %42 = arith.maximumf %40, %41 : vector<2x16xf32>
    %43 = vector.extract_strided_slice %33 {offsets = [0, 96], sizes = [2, 16], strides = [1, 1]} : vector<2x128xf32> to vector<2x16xf32>
    %44 = vector.extract_strided_slice %33 {offsets = [0, 112], sizes = [2, 16], strides = [1, 1]} : vector<2x128xf32> to vector<2x16xf32>
    %45 = arith.maximumf %43, %44 : vector<2x16xf32>
    %46 = tpu.concatenate %36, %39, %42, %45 in 1 : vector<2x16xf32>, vector<2x16xf32>, vector<2x16xf32>, vector<2x16xf32> -> vector<2x64xf32>
    %47 = arith.truncf %46 : vector<2x64xf32> to vector<2x64xbf16>
    %c0_18 = arith.constant 0 : index
    %c0_19 = arith.constant 0 : index
    %48 = vector.load %arg8[%c0_18, %c0_19] : memref<64x128xbf16, #tpu.memory_space<vmem>>, vector<64x128xbf16>
    %cst_20 = arith.constant dense<0.000000e+00> : vector<2x128xf32>
    %49 = tpu.matmul %47, %48, %cst_20 {dimension_numbers = #tpu.dot_dimension_numbers<[1], [0], [0], [1], [0, 0, 1, 1], [], []>} : vector<2x64xbf16>, vector<64x128xbf16>, vector<2x128xf32> -> vector<2x128xf32>
    %c0_21 = arith.constant 0 : index
    %c0_22 = arith.constant 0 : index
    %50 = vector.load %arg9[%c0_21, %c0_22] : memref<1x128xf32, #tpu.memory_space<vmem>>, vector<1x128xf32>
    %51 = vector.broadcast %50 : vector<1x128xf32> to vector<2x128xf32>
    %52 = arith.addf %49, %51 : vector<2x128xf32>
    %cst_23 = arith.constant 5.000000e-01 : f32
    %53 = vector.broadcast %cst_23 : f32 to vector<2x128xf32>
    %54 = arith.mulf %53, %52 : vector<2x128xf32>
    %cst_24 = arith.constant 4.471500e-02 : f32
    %55 = vector.broadcast %cst_24 : f32 to vector<2x128xf32>
    %56 = arith.mulf %55, %52 : vector<2x128xf32>
    %57 = arith.mulf %56, %52 : vector<2x128xf32>
    %58 = arith.mulf %57, %52 : vector<2x128xf32>
    %59 = arith.addf %52, %58 : vector<2x128xf32>
    %cst_25 = arith.constant 0.797884583 : f32
    %60 = vector.broadcast %cst_25 : f32 to vector<2x128xf32>
    %61 = arith.mulf %60, %59 : vector<2x128xf32>
    %62 = math.tanh %61 : vector<2x128xf32>
    %cst_26 = arith.constant 1.000000e+00 : f32
    %63 = vector.broadcast %cst_26 : f32 to vector<2x128xf32>
    %64 = arith.addf %63, %62 : vector<2x128xf32>
    %65 = arith.mulf %54, %64 : vector<2x128xf32>
    %66 = vector.extract_strided_slice %65 {offsets = [0, 0], sizes = [2, 32], strides = [1, 1]} : vector<2x128xf32> to vector<2x32xf32>
    %67 = vector.extract_strided_slice %65 {offsets = [0, 32], sizes = [2, 32], strides = [1, 1]} : vector<2x128xf32> to vector<2x32xf32>
    %68 = arith.maximumf %66, %67 : vector<2x32xf32>
    %69 = vector.extract_strided_slice %65 {offsets = [0, 64], sizes = [2, 32], strides = [1, 1]} : vector<2x128xf32> to vector<2x32xf32>
    %70 = vector.extract_strided_slice %65 {offsets = [0, 96], sizes = [2, 32], strides = [1, 1]} : vector<2x128xf32> to vector<2x32xf32>
    %71 = arith.maximumf %69, %70 : vector<2x32xf32>
    %72 = tpu.concatenate %68, %71 in 1 : vector<2x32xf32>, vector<2x32xf32> -> vector<2x64xf32>
    %73 = arith.truncf %72 : vector<2x64xf32> to vector<2x64xbf16>
    %c0_27 = arith.constant 0 : index
    %c0_28 = arith.constant 0 : index
    %74 = vector.load %arg10[%c0_27, %c0_28] : memref<64x84xbf16, #tpu.memory_space<vmem>>, vector<64x84xbf16>
    %cst_29 = arith.constant dense<0.000000e+00> : vector<2x84xf32>
    %75 = tpu.matmul %73, %74, %cst_29 {dimension_numbers = #tpu.dot_dimension_numbers<[1], [0], [0], [1], [0, 0, 1, 1], [], []>} : vector<2x64xbf16>, vector<64x84xbf16>, vector<2x84xf32> -> vector<2x84xf32>
    %c0_30 = arith.constant 0 : index
    %c0_31 = arith.constant 0 : index
    %76 = vector.load %arg11[%c0_30, %c0_31] : memref<1x84xf32, #tpu.memory_space<vmem>>, vector<1x84xf32>
    %77 = vector.broadcast %76 : vector<1x84xf32> to vector<2x84xf32>
    %78 = arith.addf %75, %77 : vector<2x84xf32>
    %c0_32 = arith.constant 0 : index
    %c0_33 = arith.constant 0 : index
    %79 = vector.load %arg12[%c0_32, %c0_33] : memref<1x84xf32, #tpu.memory_space<vmem>>, vector<1x84xf32>
    %c0_34 = arith.constant 0 : index
    %c0_35 = arith.constant 0 : index
    %80 = vector.load %arg13[%c0_34, %c0_35] : memref<1x84xf32, #tpu.memory_space<vmem>>, vector<1x84xf32>
    %c0_36 = arith.constant 0 : index
    %c0_37 = arith.constant 0 : index
    %81 = vector.load %arg14[%c0_36, %c0_37] : memref<1x84xf32, #tpu.memory_space<vmem>>, vector<1x84xf32>
    %c0_38 = arith.constant 0 : index
    %c0_39 = arith.constant 0 : index
    %82 = vector.load %arg15[%c0_38, %c0_39] : memref<1x84xf32, #tpu.memory_space<vmem>>, vector<1x84xf32>
    %cst_40 = arith.constant 9.99999974E-6 : f32
    %83 = vector.broadcast %cst_40 : f32 to vector<1x84xf32>
    %84 = arith.addf %82, %83 : vector<1x84xf32>
    %85 = math.rsqrt %84 : vector<1x84xf32>
    %86 = arith.mulf %79, %85 : vector<1x84xf32>
    %87 = vector.broadcast %86 : vector<1x84xf32> to vector<2x84xf32>
    %88 = arith.mulf %78, %87 : vector<2x84xf32>
    %89 = arith.mulf %81, %86 : vector<1x84xf32>
    %90 = arith.subf %80, %89 : vector<1x84xf32>
    %91 = vector.broadcast %90 : vector<1x84xf32> to vector<2x84xf32>
    %92 = arith.addf %88, %91 : vector<2x84xf32>
    %cst_41 = arith.constant 5.000000e-01 : f32
    %93 = vector.broadcast %cst_41 : f32 to vector<2x84xf32>
    %94 = arith.mulf %93, %92 : vector<2x84xf32>
    %cst_42 = arith.constant 4.471500e-02 : f32
    %95 = vector.broadcast %cst_42 : f32 to vector<2x84xf32>
    %96 = arith.mulf %95, %92 : vector<2x84xf32>
    %97 = arith.mulf %96, %92 : vector<2x84xf32>
    %98 = arith.mulf %97, %92 : vector<2x84xf32>
    %99 = arith.addf %92, %98 : vector<2x84xf32>
    %cst_43 = arith.constant 0.797884583 : f32
    %100 = vector.broadcast %cst_43 : f32 to vector<2x84xf32>
    %101 = arith.mulf %100, %99 : vector<2x84xf32>
    %102 = math.tanh %101 : vector<2x84xf32>
    %cst_44 = arith.constant 1.000000e+00 : f32
    %103 = vector.broadcast %cst_44 : f32 to vector<2x84xf32>
    %104 = arith.addf %103, %102 : vector<2x84xf32>
    %105 = arith.mulf %94, %104 : vector<2x84xf32>
    %106 = vector.extract_strided_slice %105 {offsets = [0, 0], sizes = [2, 42], strides = [1, 1]} : vector<2x84xf32> to vector<2x42xf32>
    %107 = vector.extract_strided_slice %105 {offsets = [0, 42], sizes = [2, 42], strides = [1, 1]} : vector<2x84xf32> to vector<2x42xf32>
    %108 = arith.maximumf %106, %107 : vector<2x42xf32>
    %109 = arith.truncf %108 : vector<2x42xf32> to vector<2x42xbf16>
    %c0_45 = arith.constant 0 : index
    %c0_46 = arith.constant 0 : index
    %110 = vector.load %arg16[%c0_45, %c0_46] : memref<42x42xbf16, #tpu.memory_space<vmem>>, vector<42x42xbf16>
    %cst_47 = arith.constant dense<0.000000e+00> : vector<2x42xf32>
    %111 = tpu.matmul %109, %110, %cst_47 {dimension_numbers = #tpu.dot_dimension_numbers<[1], [0], [0], [1], [0, 0, 1, 1], [], []>} : vector<2x42xbf16>, vector<42x42xbf16>, vector<2x42xf32> -> vector<2x42xf32>
    %c0_48 = arith.constant 0 : index
    %c0_49 = arith.constant 0 : index
    %112 = vector.load %arg17[%c0_48, %c0_49] : memref<1x42xf32, #tpu.memory_space<vmem>>, vector<1x42xf32>
    %113 = vector.broadcast %112 : vector<1x42xf32> to vector<2x42xf32>
    %114 = arith.addf %111, %113 : vector<2x42xf32>
    %cst_50 = arith.constant 5.000000e-01 : f32
    %115 = vector.broadcast %cst_50 : f32 to vector<2x42xf32>
    %116 = arith.mulf %115, %114 : vector<2x42xf32>
    %cst_51 = arith.constant 4.471500e-02 : f32
    %117 = vector.broadcast %cst_51 : f32 to vector<2x42xf32>
    %118 = arith.mulf %117, %114 : vector<2x42xf32>
    %119 = arith.mulf %118, %114 : vector<2x42xf32>
    %120 = arith.mulf %119, %114 : vector<2x42xf32>
    %121 = arith.addf %114, %120 : vector<2x42xf32>
    %cst_52 = arith.constant 0.797884583 : f32
    %122 = vector.broadcast %cst_52 : f32 to vector<2x42xf32>
    %123 = arith.mulf %122, %121 : vector<2x42xf32>
    %124 = math.tanh %123 : vector<2x42xf32>
    %cst_53 = arith.constant 1.000000e+00 : f32
    %125 = vector.broadcast %cst_53 : f32 to vector<2x42xf32>
    %126 = arith.addf %125, %124 : vector<2x42xf32>
    %127 = arith.mulf %116, %126 : vector<2x42xf32>
    %128 = arith.truncf %127 : vector<2x42xf32> to vector<2x42xbf16>
    %c0_54 = arith.constant 0 : index
    %c0_55 = arith.constant 0 : index
    %129 = vector.load %arg18[%c0_54, %c0_55] : memref<42x32xbf16, #tpu.memory_space<vmem>>, vector<42x32xbf16>
    %cst_56 = arith.constant dense<0.000000e+00> : vector<2x32xf32>
    %130 = tpu.matmul %128, %129, %cst_56 {dimension_numbers = #tpu.dot_dimension_numbers<[1], [0], [0], [1], [0, 0, 1, 1], [], []>} : vector<2x42xbf16>, vector<42x32xbf16>, vector<2x32xf32> -> vector<2x32xf32>
    %c0_57 = arith.constant 0 : index
    %c0_58 = arith.constant 0 : index
    %131 = vector.load %arg19[%c0_57, %c0_58] : memref<1x32xf32, #tpu.memory_space<vmem>>, vector<1x32xf32>
    %132 = vector.broadcast %131 : vector<1x32xf32> to vector<2x32xf32>
    %133 = arith.addf %130, %132 : vector<2x32xf32>
    %cst_59 = arith.constant 5.000000e-01 : f32
    %134 = vector.broadcast %cst_59 : f32 to vector<2x32xf32>
    %135 = arith.mulf %134, %133 : vector<2x32xf32>
    %cst_60 = arith.constant 4.471500e-02 : f32
    %136 = vector.broadcast %cst_60 : f32 to vector<2x32xf32>
    %137 = arith.mulf %136, %133 : vector<2x32xf32>
    %138 = arith.mulf %137, %133 : vector<2x32xf32>
    %139 = arith.mulf %138, %133 : vector<2x32xf32>
    %140 = arith.addf %133, %139 : vector<2x32xf32>
    %cst_61 = arith.constant 0.797884583 : f32
    %141 = vector.broadcast %cst_61 : f32 to vector<2x32xf32>
    %142 = arith.mulf %141, %140 : vector<2x32xf32>
    %143 = math.tanh %142 : vector<2x32xf32>
    %cst_62 = arith.constant 1.000000e+00 : f32
    %144 = vector.broadcast %cst_62 : f32 to vector<2x32xf32>
    %145 = arith.addf %144, %143 : vector<2x32xf32>
    %146 = arith.mulf %135, %145 : vector<2x32xf32>
    %147 = arith.truncf %146 : vector<2x32xf32> to vector<2x32xbf16>
    %c0_63 = arith.constant 0 : index
    %c0_64 = arith.constant 0 : index
    %148 = vector.load %arg20[%c0_63, %c0_64] : memref<32x6xbf16, #tpu.memory_space<vmem>>, vector<32x6xbf16>
    %cst_65 = arith.constant dense<0.000000e+00> : vector<2x6xf32>
    %149 = tpu.matmul %147, %148, %cst_65 {dimension_numbers = #tpu.dot_dimension_numbers<[1], [0], [0], [1], [0, 0, 1, 1], [], []>} : vector<2x32xbf16>, vector<32x6xbf16>, vector<2x6xf32> -> vector<2x6xf32>
    %c0_66 = arith.constant 0 : index
    %c0_67 = arith.constant 0 : index
    %150 = vector.load %arg21[%c0_66, %c0_67] : memref<1x6xf32, #tpu.memory_space<vmem>>, vector<1x6xf32>
    %151 = vector.broadcast %150 : vector<1x6xf32> to vector<2x6xf32>
    %152 = arith.addf %149, %151 : vector<2x6xf32>
    %153 = math.tanh %152 : vector<2x6xf32>
    %c0_68 = arith.constant 0 : index
    %c0_69 = arith.constant 0 : index
    %154 = vector.load %arg22[%c0_68, %c0_69] : memref<2x6xf32, #tpu.memory_space<vmem>>, vector<2x6xf32>
    tpu.vector_store %arg22[%c0_68, %c0_69], %153 {strides = array<i32>} : memref<2x6xf32, #tpu.memory_space<vmem>>, vector<2x6xf32>,
    return
  }
  func.func @transform_0(%arg0: i32) -> (i32, i32) {
    %c0_i32 = arith.constant 0 : i32
    %c0_i32_0 = arith.constant 0 : i32
    return %arg0, %c0_i32 : i32, i32
  }
  func.func @transform_1(%arg0: i32) -> (i32, i32) {
    %c0_i32 = arith.constant 0 : i32
    %c0_i32_0 = arith.constant 0 : i32
    %c0_i32_1 = arith.constant 0 : i32
    return %c0_i32, %c0_i32_0 : i32, i32
  }
  func.func @transform_2(%arg0: i32) -> (i32, i32) {
    %c0_i32 = arith.constant 0 : i32
    %c0_i32_0 = arith.constant 0 : i32
    %c0_i32_1 = arith.constant 0 : i32
    return %c0_i32, %c0_i32_0 : i32, i32
  }
  func.func @transform_3(%arg0: i32) -> (i32, i32) {
    %c0_i32 = arith.constant 0 : i32
    %c0_i32_0 = arith.constant 0 : i32
    %c0_i32_1 = arith.constant 0 : i32
    return %c0_i32, %c0_i32_0 : i32, i32
  }
  func.func @transform_4(%arg0: i32) -> (i32, i32) {
    %c0_i32 = arith.constant 0 : i32
    %c0_i32_0 = arith.constant 0 : i32
    %c0_i32_1 = arith.constant 0 : i32
    return %c0_i32, %c0_i32_0 : i32, i32
  }
  func.func @transform_5(%arg0: i32) -> (i32, i32) {
    %c0_i32 = arith.constant 0 : i32
    %c0_i32_0 = arith.constant 0 : i32
    %c0_i32_1 = arith.constant 0 : i32
    return %c0_i32, %c0_i32_0 : i32, i32
  }
  func.func @transform_6(%arg0: i32) -> (i32, i32) {
    %c0_i32 = arith.constant 0 : i32
    %c0_i32_0 = arith.constant 0 : i32
    %c0_i32_1 = arith.constant 0 : i32
    return %c0_i32, %c0_i32_0 : i32, i32
  }
  func.func @transform_7(%arg0: i32) -> (i32, i32) {
    %c0_i32 = arith.constant 0 : i32
    %c0_i32_0 = arith.constant 0 : i32
    %c0_i32_1 = arith.constant 0 : i32
    return %c0_i32, %c0_i32_0 : i32, i32
  }
  func.func @transform_8(%arg0: i32) -> (i32, i32) {
    %c0_i32 = arith.constant 0 : i32
    %c0_i32_0 = arith.constant 0 : i32
    %c0_i32_1 = arith.constant 0 : i32
    return %c0_i32, %c0_i32_0 : i32, i32
  }
  func.func @transform_9(%arg0: i32) -> (i32, i32) {
    %c0_i32 = arith.constant 0 : i32
    %c0_i32_0 = arith.constant 0 : i32
    %c0_i32_1 = arith.constant 0 : i32
    return %c0_i32, %c0_i32_0 : i32, i32
  }
  func.func @transform_10(%arg0: i32) -> (i32, i32) {
    %c0_i32 = arith.constant 0 : i32
    %c0_i32_0 = arith.constant 0 : i32
    %c0_i32_1 = arith.constant 0 : i32
    return %c0_i32, %c0_i32_0 : i32, i32
  }
  func.func @transform_11(%arg0: i32) -> (i32, i32) {
    %c0_i32 = arith.constant 0 : i32
    %c0_i32_0 = arith.constant 0 : i32
    %c0_i32_1 = arith.constant 0 : i32
    return %c0_i32, %c0_i32_0 : i32, i32
  }
  func.func @transform_12(%arg0: i32) -> (i32, i32) {
    %c0_i32 = arith.constant 0 : i32
    %c0_i32_0 = arith.constant 0 : i32
    %c0_i32_1 = arith.constant 0 : i32
    return %c0_i32, %c0_i32_0 : i32, i32
  }
  func.func @transform_13(%arg0: i32) -> (i32, i32) {
    %c0_i32 = arith.constant 0 : i32
    %c0_i32_0 = arith.constant 0 : i32
    %c0_i32_1 = arith.constant 0 : i32
    return %c0_i32, %c0_i32_0 : i32, i32
  }
  func.func @transform_14(%arg0: i32) -> (i32, i32) {
    %c0_i32 = arith.constant 0 : i32
    %c0_i32_0 = arith.constant 0 : i32
    %c0_i32_1 = arith.constant 0 : i32
    return %c0_i32, %c0_i32_0 : i32, i32
  }
  func.func @transform_15(%arg0: i32) -> (i32, i32) {
    %c0_i32 = arith.constant 0 : i32
    %c0_i32_0 = arith.constant 0 : i32
    %c0_i32_1 = arith.constant 0 : i32
    return %c0_i32, %c0_i32_0 : i32, i32
  }
  func.func @transform_16(%arg0: i32) -> (i32, i32) {
    %c0_i32 = arith.constant 0 : i32
    %c0_i32_0 = arith.constant 0 : i32
    %c0_i32_1 = arith.constant 0 : i32
    return %c0_i32, %c0_i32_0 : i32, i32
  }
  func.func @transform_17(%arg0: i32) -> (i32, i32) {
    %c0_i32 = arith.constant 0 : i32
    %c0_i32_0 = arith.constant 0 : i32
    %c0_i32_1 = arith.constant 0 : i32
    return %c0_i32, %c0_i32_0 : i32, i32
  }
  func.func @transform_18(%arg0: i32) -> (i32, i32) {
    %c0_i32 = arith.constant 0 : i32
    %c0_i32_0 = arith.constant 0 : i32
    %c0_i32_1 = arith.constant 0 : i32
    return %c0_i32, %c0_i32_0 : i32, i32
  }
  func.func @transform_19(%arg0: i32) -> (i32, i32) {
    %c0_i32 = arith.constant 0 : i32
    %c0_i32_0 = arith.constant 0 : i32
    %c0_i32_1 = arith.constant 0 : i32
    return %c0_i32, %c0_i32_0 : i32, i32
  }
  func.func @transform_20(%arg0: i32) -> (i32, i32) {
    %c0_i32 = arith.constant 0 : i32
    %c0_i32_0 = arith.constant 0 : i32
    %c0_i32_1 = arith.constant 0 : i32
    return %c0_i32, %c0_i32_0 : i32, i32
  }
  func.func @transform_21(%arg0: i32) -> (i32, i32) {
    %c0_i32 = arith.constant 0 : i32
    %c0_i32_0 = arith.constant 0 : i32
    return %arg0, %c0_i32 : i32, i32
  }
}

</mosaic_0001>

<llo_original>
// kernel: forward.1
$region0: #{forward.1}
  #allocation0 [shape = 'u32[]', space=smem, size = 0x4, offset = 0x4, fixed_abs, tag = 'smem constant byte address 0x4 - core index']
  #allocation1 [shape = 'u32[144,128]{1,0:T(1,128)}', space=vmem, size = 0x12000, scoped, tag = 'internal scratch']
  %s0 = inlined_call_operand.vmem [shape: f32[2,56], index: 0, kind: input, shape index: {}]
  %s1 = inlined_call_operand.vmem [shape: bf16[56,128], index: 1, kind: input, shape index: {}]
  %s2 = inlined_call_operand.vmem [shape: f32[1,128], index: 2, kind: input, shape index: {}]
  %s3 = inlined_call_operand.vmem [shape: f32[1,128], index: 3, kind: input, shape index: {}]
  %s4 = inlined_call_operand.hbm [shape: f32[1,128], index: 4, kind: input, shape index: {}]
  %s5 = inlined_call_operand.vmem [shape: f32[1,128], index: 5, kind: input, shape index: {}]
  %s6 = inlined_call_operand.vmem [shape: f32[1,128], index: 6, kind: input, shape index: {}]
  %s7 = inlined_call_operand.vmem [shape: bf16[64,128], index: 7, kind: input, shape index: {}]
  %s8 = inlined_call_operand.hbm [shape: f32[1,128], index: 8, kind: input, shape index: {}]
  %s9 = inlined_call_operand.vmem [shape: bf16[64,84], index: 9, kind: input, shape index: {}]
  %s10 = inlined_call_operand.hbm [shape: f32[1,84], index: 10, kind: input, shape index: {}]
  %s11 = inlined_call_operand.vmem [shape: f32[1,84], index: 11, kind: input, shape index: {}]
  %s12 = inlined_call_operand.hbm [shape: f32[1,84], index: 12, kind: input, shape index: {}]
  %s13 = inlined_call_operand.vmem [shape: f32[1,84], index: 13, kind: input, shape index: {}]
  %s14 = inlined_call_operand.vmem [shape: f32[1,84], index: 14, kind: input, shape index: {}]
  %s15 = inlined_call_operand.vmem [shape: bf16[42,42], index: 15, kind: input, shape index: {}]
  %s16 = inlined_call_operand.hbm [shape: f32[1,42], index: 16, kind: input, shape index: {}]
  %s17 = inlined_call_operand.vmem [shape: bf16[42,32], index: 17, kind: input, shape index: {}]
  %s18 = inlined_call_operand.hbm [shape: f32[1,32], index: 18, kind: input, shape index: {}]
  %s19 = inlined_call_operand.vmem [shape: bf16[32,6], index: 19, kind: input, shape index: {}]
  %s20 = inlined_call_operand.hbm [shape: f32[1,6], index: 20, kind: input, shape index: {}]
  %s21 = inlined_call_operand.hbm [shape: f32[2,6], index: 21, kind: output, shape index: {}]
  %s22 = sld [smem:[#allocation0]]
  $region122: #{forward.1} parent=0
    _
  %s24 = ssub.s32 1, %s22
  %s25 = scalar_select 0, %s24, %s22
  $region1: #{forward.1} parent=0
    #allocation2 [shape = 'u8[512]{0}', space=vmem, size = 0x400, scoped, tag = 'input window, operand 4, single buffered']
    #allocation3 [shape = 's32[1]{0}', space=sflag, size = 0x4, scoped, tag = 'scoped memory for forward.1']
    #allocation4 [shape = 's32[1]{0}', space=sflag, size = 0x4, scoped, tag = 'scoped memory for forward.1']
    #allocation5 [shape = 'u8[512]{0}', space=vmem, size = 0x400, scoped, tag = 'input window, operand 8, single buffered']
    #allocation6 [shape = 's32[1]{0}', space=sflag, size = 0x4, scoped, tag = 'scoped memory for forward.1']
    #allocation7 [shape = 'u8[512]{0}', space=vmem, size = 0x400, scoped, tag = 'input window, operand 10, single buffered']
    #allocation8 [shape = 'u8[512]{0}', space=vmem, size = 0x400, scoped, tag = 'input window, operand 12, single buffered']
    #allocation9 [shape = 's32[1]{0}', space=sflag, size = 0x4, scoped, tag = 'scoped memory for forward.1']
    #allocation10 [shape = 'u8[512]{0}', space=vmem, size = 0x400, scoped, tag = 'input window, operand 16, single buffered']
    #allocation11 [shape = 'u8[512]{0}', space=vmem, size = 0x400, scoped, tag = 'input window, operand 18, single buffered']
    #allocation12 [shape = 's32[1]{0}', space=sflag, size = 0x4, scoped, tag = 'scoped memory for forward.1']
    #allocation13 [shape = 'u8[512]{0}', space=vmem, size = 0x400, scoped, tag = 'input window, operand 20, single buffered']
    #allocation14 [shape = 'u8[1024]{0}', space=vmem, size = 0x400, scoped, tag = 'output window, operand 0, single buffered']
    %26 = vsyncpa [#allocation3], 0
    %27 = vsyncpa [#allocation6], 0
    %28 = vsyncpa [#allocation9], 0
    %29 = vsyncpa [#allocation12], 0
    %30 = vsyncpa [#allocation4], 0
    // Predicated region
    $region2: #{forward.1} parent=1 // pred_check
      _
    $region3: #{forward.1} parent=1 // pred_check_branch
      %32 = sbr.rel (0) target = $region5
    $region4: #{forward.1} parent=1 // pred_region
      _
    $region5: #{forward.1} parent=1 // pred_fallthru
      _
    // Predicated region
    $region6: #{forward.1} parent=1 // pred_check
      _
    $region7: #{forward.1} parent=1 // pred_check_branch
      %34 = sbr.rel (0) target = $region9
    $region8: #{forward.1} parent=1 // pred_region
      _
    $region9: #{forward.1} parent=1 // pred_fallthru
      _
    // Predicated region
    $region10: #{forward.1} parent=1 // pred_check
      _
    $region11: #{forward.1} parent=1 // pred_check_branch
      %36 = sbr.rel (0) target = $region13
    $region12: #{forward.1} parent=1 // pred_region
      _
    $region13: #{forward.1} parent=1 // pred_fallthru
      _
    // Predicated region
    $region14: #{forward.1} parent=1 // pred_check
      _
    $region15: #{forward.1} parent=1 // pred_check_branch
      %38 = sbr.rel (0) target = $region17
    $region16: #{forward.1} parent=1 // pred_region
      _
    $region17: #{forward.1} parent=1 // pred_fallthru
      _
    // Predicated region
    $region18: #{forward.1} parent=1 // pred_check
      _
    $region19: #{forward.1} parent=1 // pred_check_branch
      %40 = sbr.rel (0) target = $region21
    $region20: #{forward.1} parent=1 // pred_region
      %s42 = ssub.s32 16, 16
      %43 = vsyncadd [#allocation3], %s42
      %s45 = sshll.u32 [#allocation2], 4
      %s46 = int_to_ptr.vmem [resolvable:$true] %s45
      %48 = dma.hbm_to_vmem [thread:$0]  %s4, 16, %s46, [#allocation3]
    $region21: #{forward.1} parent=1 // pred_fallthru
      _
    // Predicated region
    $region22: #{forward.1} parent=1 // pred_check
      _
    $region23: #{forward.1} parent=1 // pred_check_branch
      %50 = sbr.rel (0) target = $region25
    $region24: #{forward.1} parent=1 // pred_region
      _
    $region25: #{forward.1} parent=1 // pred_fallthru
      _
    // Predicated region
    $region26: #{forward.1} parent=1 // pred_check
      _
    $region27: #{forward.1} parent=1 // pred_check_branch
      %52 = sbr.rel (0) target = $region29
    $region28: #{forward.1} parent=1 // pred_region
      _
    $region29: #{forward.1} parent=1 // pred_fallthru
      _
    // Predicated region
    $region30: #{forward.1} parent=1 // pred_check
      _
    $region31: #{forward.1} parent=1 // pred_check_branch
      %54 = sbr.rel (0) target = $region33
    $region32: #{forward.1} parent=1 // pred_region
      _
    $region33: #{forward.1} parent=1 // pred_fallthru
      _
    // Predicated region
    $region34: #{forward.1} parent=1 // pred_check
      _
    $region35: #{forward.1} parent=1 // pred_check_branch
      %56 = sbr.rel (0) target = $region37
    $region36: #{forward.1} parent=1 // pred_region
      %s58 = ssub.s32 16, 16
      %59 = vsyncadd [#allocation6], %s58
      %s61 = sshll.u32 [#allocation5], 4
      %s62 = int_to_ptr.vmem [resolvable:$true] %s61
      %64 = dma.hbm_to_vmem [thread:$0]  %s8, 16, %s62, [#allocation6]
    $region37: #{forward.1} parent=1 // pred_fallthru
      _
    // Predicated region
    $region38: #{forward.1} parent=1 // pred_check
      _
    $region39: #{forward.1} parent=1 // pred_check_branch
      %66 = sbr.rel (0) target = $region41
    $region40: #{forward.1} parent=1 // pred_region
      _
    $region41: #{forward.1} parent=1 // pred_fallthru
      _
    // Predicated region
    $region42: #{forward.1} parent=1 // pred_check
      _
    $region43: #{forward.1} parent=1 // pred_check_branch
      %68 = sbr.rel (0) target = $region45
    $region44: #{forward.1} parent=1 // pred_region
      %s70 = ssub.s32 16, 16
      %71 = vsyncadd [#allocation6], %s70
      %s73 = sshll.u32 [#allocation7], 4
      %s74 = int_to_ptr.vmem [resolvable:$true] %s73
      %76 = dma.hbm_to_vmem [thread:$0]  %s10, 16, %s74, [#allocation6]
    $region45: #{forward.1} parent=1 // pred_fallthru
      _
    // Predicated region
    $region46: #{forward.1} parent=1 // pred_check
      _
    $region47: #{forward.1} parent=1 // pred_check_branch
      %78 = sbr.rel (0) target = $region49
    $region48: #{forward.1} parent=1 // pred_region
      _
    $region49: #{forward.1} parent=1 // pred_fallthru
      _
    // Predicated region
    $region50: #{forward.1} parent=1 // pred_check
      _
    $region51: #{forward.1} parent=1 // pred_check_branch
      %80 = sbr.rel (0) target = $region53
    $region52: #{forward.1} parent=1 // pred_region
      %s82 = ssub.s32 16, 16
      %83 = vsyncadd [#allocation9], %s82
      %s85 = sshll.u32 [#allocation8], 4
      %s86 = int_to_ptr.vmem [resolvable:$true] %s85
      %88 = dma.hbm_to_vmem [thread:$0]  %s12, 16, %s86, [#allocation9]
    $region53: #{forward.1} parent=1 // pred_fallthru
      _
    // Predicated region
    $region54: #{forward.1} parent=1 // pred_check
      _
    $region55: #{forward.1} parent=1 // pred_check_branch
      %90 = sbr.rel (0) target = $region57
    $region56: #{forward.1} parent=1 // pred_region
      _
    $region57: #{forward.1} parent=1 // pred_fallthru
      _
    // Predicated region
    $region58: #{forward.1} parent=1 // pred_check
      _
    $region59: #{forward.1} parent=1 // pred_check_branch
      %92 = sbr.rel (0) target = $region61
    $region60: #{forward.1} parent=1 // pred_region
      _
    $region61: #{forward.1} parent=1 // pred_fallthru
      _
    // Predicated region
    $region62: #{forward.1} parent=1 // pred_check
      _
    $region63: #{forward.1} parent=1 // pred_check_branch
      %94 = sbr.rel (0) target = $region65
    $region64: #{forward.1} parent=1 // pred_region
      _
    $region65: #{forward.1} parent=1 // pred_fallthru
      _
    // Predicated region
    $region66: #{forward.1} parent=1 // pred_check
      _
    $region67: #{forward.1} parent=1 // pred_check_branch
      %96 = sbr.rel (0) target = $region69
    $region68: #{forward.1} parent=1 // pred_region
      %s98 = ssub.s32 16, 16
      %99 = vsyncadd [#allocation9], %s98
      %s101 = sshll.u32 [#allocation10], 4
      %s102 = int_to_ptr.vmem [resolvable:$true] %s101
      %104 = dma.hbm_to_vmem [thread:$0]  %s16, 16, %s102, [#allocation9]
    $region69: #{forward.1} parent=1 // pred_fallthru
      _
    // Predicated region
    $region70: #{forward.1} parent=1 // pred_check
      _
    $region71: #{forward.1} parent=1 // pred_check_branch
      %106 = sbr.rel (0) target = $region73
    $region72: #{forward.1} parent=1 // pred_region
      _
    $region73: #{forward.1} parent=1 // pred_fallthru
      _
    // Predicated region
    $region74: #{forward.1} parent=1 // pred_check
      _
    $region75: #{forward.1} parent=1 // pred_check_branch
      %108 = sbr.rel (0) target = $region77
    $region76: #{forward.1} parent=1 // pred_region
      %s110 = ssub.s32 16, 16
      %111 = vsyncadd [#allocation12], %s110
      %s113 = sshll.u32 [#allocation11], 4
      %s114 = int_to_ptr.vmem [resolvable:$true] %s113
      %116 = dma.hbm_to_vmem [thread:$0]  %s18, 16, %s114, [#allocation12]
    $region77: #{forward.1} parent=1 // pred_fallthru
      _
    // Predicated region
    $region78: #{forward.1} parent=1 // pred_check
      _
    $region79: #{forward.1} parent=1 // pred_check_branch
      %118 = sbr.rel (0) target = $region81
    $region80: #{forward.1} parent=1 // pred_region
      _
    $region81: #{forward.1} parent=1 // pred_fallthru
      _
    // Predicated region
    $region82: #{forward.1} parent=1 // pred_check
      _
    $region83: #{forward.1} parent=1 // pred_check_branch
      %120 = sbr.rel (0) target = $region85
    $region84: #{forward.1} parent=1 // pred_region
      %s122 = ssub.s32 16, 16
      %123 = vsyncadd [#allocation12], %s122
      %s125 = sshll.u32 [#allocation13], 4
      %s126 = int_to_ptr.vmem [resolvable:$true] %s125
      %128 = dma.hbm_to_vmem [thread:$0]  %s20, 16, %s126, [#allocation12]
    $region85: #{forward.1} parent=1 // pred_fallthru
      _
    // Predicated region
    $region86: #{forward.1} parent=1 // pred_check
      _
    $region87: #{forward.1} parent=1 // pred_check_branch
      %130 = sbr.rel (0) target = $region89
    $region88: #{forward.1} parent=1 // pred_region
      %131 = dma.done [#allocation3], 16
    $region89: #{forward.1} parent=1 // pred_fallthru
      _
    // Predicated region
    $region90: #{forward.1} parent=1 // pred_check
      _
    $region91: #{forward.1} parent=1 // pred_check_branch
      %133 = sbr.rel (0) target = $region93
    $region92: #{forward.1} parent=1 // pred_region
      %134 = dma.done [#allocation6], 16
    $region93: #{forward.1} parent=1 // pred_fallthru
      _
    // Predicated region
    $region94: #{forward.1} parent=1 // pred_check
      _
    $region95: #{forward.1} parent=1 // pred_check_branch
      %136 = sbr.rel (0) target = $region97
    $region96: #{forward.1} parent=1 // pred_region
      %137 = dma.done [#allocation6], 16
    $region97: #{forward.1} parent=1 // pred_fallthru
      _
    // Predicated region
    $region98: #{forward.1} parent=1 // pred_check
      _
    $region99: #{forward.1} parent=1 // pred_check_branch
      %139 = sbr.rel (0) target = $region101
    $region100: #{forward.1} parent=1 // pred_region
      %140 = dma.done [#allocation9], 16
    $region101: #{forward.1} parent=1 // pred_fallthru
      _
    // Predicated region
    $region102: #{forward.1} parent=1 // pred_check
      _
    $region103: #{forward.1} parent=1 // pred_check_branch
      %142 = sbr.rel (0) target = $region105
    $region104: #{forward.1} parent=1 // pred_region
      %143 = dma.done [#allocation9], 16
    $region105: #{forward.1} parent=1 // pred_fallthru
      _
    // Predicated region
    $region106: #{forward.1} parent=1 // pred_check
      _
    $region107: #{forward.1} parent=1 // pred_check_branch
      %145 = sbr.rel (0) target = $region109
    $region108: #{forward.1} parent=1 // pred_region
      %146 = dma.done [#allocation12], 16
    $region109: #{forward.1} parent=1 // pred_fallthru
      _
    // Predicated region
    $region110: #{forward.1} parent=1 // pred_check
      _
    $region111: #{forward.1} parent=1 // pred_check_branch
      %148 = sbr.rel (0) target = $region113
    $region112: #{forward.1} parent=1 // pred_region
      %149 = dma.done [#allocation12], 16
    $region113: #{forward.1} parent=1 // pred_fallthru
      _
    %v151 = vld [vmem:[%s0] sm:$0x3]
    %v152 = vpack.c.bf16 %v151, %v151
    %v153 = vld [vmem:[%s1] sm:$0xf]
    %v154 = vld [vmem:[%s1 + $0x4] sm:$0xf]
    %v155 = vld [vmem:[%s1 + $0x8] sm:$0xf]
    %v156 = vld [vmem:[%s1 + $0xc] sm:$0xf]
    %v157 = vld [vmem:[%s1 + $0x10] sm:$0xf]
    %v158 = vld [vmem:[%s1 + $0x14] sm:$0xf]
    %v159 = vld [vmem:[%s1 + $0x18] sm:$0xf]
    %v160 = vld [vmem:[%s2] sm:$0x1]
    %v162 = vlaneseq
    %v163 = vshrl.u32 %v162, 7
    %v164 = vsub.s32 0, %v163
    %v165 = vrot.slane %v160, %v164
    %v174 = vunpack.c.l.b16 %v153
    %v175 = vunpack.c.l.b16 %v154
    %v176 = vunpack.c.l.b16 %v155
    %v177 = vunpack.c.l.b16 %v156
    %v178 = vunpack.c.l.b16 %v157
    %v179 = vunpack.c.l.b16 %v158
    %v180 = vunpack.c.l.b16 %v159
    %v181 = vpack.c.b16 %v175, %v174
    %v182 = vpack.c.b16 %v177, %v176
    %v183 = vpack.c.b16 %v179, %v178
    %v184 = vpack.c.b16 %v180, %v180
    %vm188 = vcmask 457728
    %v190 = vsel %vm188, %v152, 0
    %vm192 = vcmask 1043456
    %v194 = vsel %vm192, %v184, 0
    %196 = vmatprep.subr.bf16.mxu0 0
    %197 = vmatpush1.bf16.msra.mxu0 %v181
    %198 = vmatprep.subr.bf16.mxu0 0
    %199 = vmatpush1.bf16.msra.mxu0 %v182
    %200 = vmatprep.subr.bf16.mxu0 0
    %201 = vmatpush1.bf16.msra.mxu0 %v183
    %202 = vmatprep.subr.bf16.mxu0 0
    %203 = vmatpush1.bf16.msra.mxu0 %v194
    %204 = vmatprep.subr.bf16.mxu0 0
    %205 = vmatpush1.bf16.msra.mxu0 0
    %206 = vmatprep.subr.bf16.mxu0 0
    %207 = vmatpush1.bf16.msra.mxu0 0
    %208 = vmatprep.subr.bf16.mxu0 0
    %209 = vmatpush1.bf16.msra.mxu0 0
    %210 = vmatprep.subr.bf16.mxu0 0
    %211 = vmatpush1.bf16.msra.mxu0 0
    %212 = vmatprep.subr.bf16.mxu0 0
    %213 = vmatpush1.bf16.msra.mxu0 0
    %214 = vmatprep.subr.bf16.mxu0 0
    %215 = vmatpush1.bf16.msra.mxu0 0
    %216 = vmatprep.subr.bf16.mxu0 0
    %217 = vmatpush1.bf16.msra.mxu0 0
    %218 = vmatprep.subr.bf16.mxu0 0
    %219 = vmatpush1.bf16.msra.mxu0 0
    %220 = vmatprep.subr.bf16.mxu0 0
    %221 = vmatpush1.bf16.msra.mxu0 0
    %222 = vmatprep.subr.bf16.mxu0 0
    %223 = vmatpush1.bf16.msra.mxu0 0
    %224 = vmatprep.subr.bf16.mxu0 0
    %225 = vmatpush1.bf16.msra.mxu0 0
    %226 = vmatprep.subr.bf16.mxu0 0
    %227 = vmatpush1.bf16.msra.mxu0 0
    %228 = vmatprep.mubr.bf16.mxu0 0
    %229 = vmatmul.mubr.bf16.gmra.mrb[0].mxu0 %v190
    %v230 = vpop.f32.mrb[0].mxu0
    %v231 = vadd.f32 %v165, %v230
    %v232 = vpop.f32.mrb[0].mxu0
    %v233 = vpop.f32.mrb[0].mxu0
    %v234 = vpop.f32.mrb[0].mxu0
    %235 = vdwg.mxu0
    %v236 = vld [vmem:[%s3] sm:$0x1]
    %v237 = vld [vmem:[#allocation2] sm:$0x1]
    %v238 = vld [vmem:[%s5] sm:$0x1]
    %v239 = vld [vmem:[%s6] sm:$0x1]
    %v240 = vadd.f32 %v239, 1e-05
    %v241 = vrsqrt.pop %v240
    %v242 = vmul.f32 %v236, %v241
    %v244 = vlaneseq
    %v245 = vshrl.u32 %v244, 7
    %v246 = vsub.s32 0, %v245
    %v247 = vrot.slane %v242, %v246
    %v249 = vmul.f32 %v231, %v247
    %v250 = vmul.f32 %v238, %v242
    %v251 = vsub.f32 %v237, %v250
    %v253 = vlaneseq
    %v254 = vshrl.u32 %v253, 7
    %v255 = vsub.s32 0, %v254
    %v256 = vrot.slane %v251, %v255
    %v258 = vadd.f32 %v249, %v256
    %v259 = vmul.f32 %v258, 0.5
    %v260 = vmul.f32 %v258, 0.044715
    %v261 = vmul.f32 %v260, %v258
    %v262 = vmul.f32 %v261, %v258
    %v263 = vadd.f32 %v258, %v262
    %v264 = vmul.f32 %v263, 0.7978846
    %v265 = vtanh.pop %v264
    %v266 = vadd.f32 %v265, 1.0
    %v267 = vmul.f32 %v259, %v266
    %269 = vrot.lane.b32.xlu0 %v267, 112
    %v270 = vpop.permute.xlu0 %269
    %v272 = vmax.f32 %v267, %v270
    %274 = vrot.lane.b32.xlu0 %v272, 112
    %v275 = vpop.permute.xlu0 %274
    %277 = vrot.lane.b32.xlu0 %v272, 96
    %v278 = vpop.permute.xlu0 %277
    %280 = vrot.lane.b32.xlu0 %v272, 80
    %v281 = vpop.permute.xlu0 %280
    %vm283 = vcmask 130048
    %v284 = vsel %vm283, %v272, %v275
    %vm285 = vcmask 261120
    %v286 = vsel %vm285, %v284, %v278
    %vm287 = vcmask 392192
    %v288 = vsel %vm287, %v286, %v281
    %v289 = vpack.c.bf16 %v288, %v288
    %v290 = vld [vmem:[%s7] sm:$0xf]
    %v291 = vld [vmem:[%s7 + $0x4] sm:$0xf]
    %v292 = vld [vmem:[%s7 + $0x8] sm:$0xf]
    %v293 = vld [vmem:[%s7 + $0xc] sm:$0xf]
    %v294 = vld [vmem:[%s7 + $0x10] sm:$0xf]
    %v295 = vld [vmem:[%s7 + $0x14] sm:$0xf]
    %v296 = vld [vmem:[%s7 + $0x18] sm:$0xf]
    %v297 = vld [vmem:[%s7 + $0x1c] sm:$0xf]
    %v298 = vld [vmem:[#allocation5] sm:$0x1]
    %v300 = vlaneseq
    %v301 = vshrl.u32 %v300, 7
    %v302 = vsub.s32 0, %v301
    %v303 = vrot.slane %v298, %v302
    %v313 = vunpack.c.l.b16 %v290
    %v314 = vunpack.c.l.b16 %v291
    %v315 = vunpack.c.l.b16 %v292
    %v316 = vunpack.c.l.b16 %v293
    %v317 = vunpack.c.l.b16 %v294
    %v318 = vunpack.c.l.b16 %v295
    %v319 = vunpack.c.l.b16 %v296
    %v320 = vunpack.c.l.b16 %v297
    %v321 = vpack.c.b16 %v314, %v313
    %v322 = vpack.c.b16 %v316, %v315
    %v323 = vpack.c.b16 %v318, %v317
    %v324 = vpack.c.b16 %v320, %v319
    %vm329 = vcmask 523264
    %v331 = vsel %vm329, %v289, 0
    %333 = vmatprep.subr.bf16.mxu0 0
    %334 = vmatpush1.bf16.msra.mxu0 %v321
    %335 = vmatprep.subr.bf16.mxu0 0
    %336 = vmatpush1.bf16.msra.mxu0 %v322
    %337 = vmatprep.subr.bf16.mxu0 0
    %338 = vmatpush1.bf16.msra.mxu0 %v323
    %339 = vmatprep.subr.bf16.mxu0 0
    %340 = vmatpush1.bf16.msra.mxu0 %v324
    %341 = vmatprep.subr.bf16.mxu0 0
    %342 = vmatpush1.bf16.msra.mxu0 0
    %343 = vmatprep.subr.bf16.mxu0 0
    %344 = vmatpush1.bf16.msra.mxu0 0
    %345 = vmatprep.subr.bf16.mxu0 0
    %346 = vmatpush1.bf16.msra.mxu0 0
    %347 = vmatprep.subr.bf16.mxu0 0
    %348 = vmatpush1.bf16.msra.mxu0 0
    %349 = vmatprep.subr.bf16.mxu0 0
    %350 = vmatpush1.bf16.msra.mxu0 0
    %351 = vmatprep.subr.bf16.mxu0 0
    %352 = vmatpush1.bf16.msra.mxu0 0
    %353 = vmatprep.subr.bf16.mxu0 0
    %354 = vmatpush1.bf16.msra.mxu0 0
    %355 = vmatprep.subr.bf16.mxu0 0
    %356 = vmatpush1.bf16.msra.mxu0 0
    %357 = vmatprep.subr.bf16.mxu0 0
    %358 = vmatpush1.bf16.msra.mxu0 0
    %359 = vmatprep.subr.bf16.mxu0 0
    %360 = vmatpush1.bf16.msra.mxu0 0
    %361 = vmatprep.subr.bf16.mxu0 0
    %362 = vmatpush1.bf16.msra.mxu0 0
    %363 = vmatprep.subr.bf16.mxu0 0
    %364 = vmatpush1.bf16.msra.mxu0 0
    %365 = vmatprep.mubr.bf16.mxu0 0
    %366 = vmatmul.mubr.bf16.gmra.mrb[0].mxu0 %v331
    %v367 = vpop.f32.mrb[0].mxu0
    %v368 = vadd.f32 %v303, %v367
    %v369 = vpop.f32.mrb[0].mxu0
    %v370 = vpop.f32.mrb[0].mxu0
    %v371 = vpop.f32.mrb[0].mxu0
    %372 = vdwg.mxu0
    %v373 = vmul.f32 %v368, 0.5
    %v374 = vmul.f32 %v368, 0.044715
    %v375 = vmul.f32 %v374, %v368
    %v376 = vmul.f32 %v375, %v368
    %v377 = vadd.f32 %v368, %v376
    %v378 = vmul.f32 %v377, 0.7978846
    %v379 = vtanh.pop %v378
    %v380 = vadd.f32 %v379, 1.0
    %v381 = vmul.f32 %v373, %v380
    %383 = vrot.lane.b32.xlu0 %v381, 96
    %v384 = vpop.permute.xlu0 %383
    %v386 = vmax.f32 %v381, %v384
    %388 = vrot.lane.b32.xlu0 %v386, 96
    %v389 = vpop.permute.xlu0 %388
    %v391 = vsel %vm285, %v386, %v389
    %v392 = vpack.c.bf16 %v391, %v391
    %v393 = vld [vmem:[%s9] sm:$0xf]
    %v394 = vld [vmem:[%s9 + $0x4] sm:$0xf]
    %v395 = vld [vmem:[%s9 + $0x8] sm:$0xf]
    %v396 = vld [vmem:[%s9 + $0xc] sm:$0xf]
    %v397 = vld [vmem:[%s9 + $0x10] sm:$0xf]
    %v398 = vld [vmem:[%s9 + $0x14] sm:$0xf]
    %v399 = vld [vmem:[%s9 + $0x18] sm:$0xf]
    %v400 = vld [vmem:[%s9 + $0x1c] sm:$0xf]
    %v401 = vld [vmem:[#allocation7] sm:$0x1]
    %v403 = vlaneseq
    %v404 = vshrl.u32 %v403, 7
    %v405 = vsub.s32 0, %v404
    %v406 = vrot.slane %v401, %v405
    %v416 = vunpack.c.l.b16 %v393
    %v417 = vunpack.c.l.b16 %v394
    %v418 = vunpack.c.l.b16 %v395
    %v419 = vunpack.c.l.b16 %v396
    %v420 = vunpack.c.l.b16 %v397
    %v421 = vunpack.c.l.b16 %v398
    %v422 = vunpack.c.l.b16 %v399
    %v423 = vunpack.c.l.b16 %v400
    %v424 = vpack.c.b16 %v417, %v416
    %v425 = vpack.c.b16 %v419, %v418
    %v426 = vpack.c.b16 %v421, %v420
    %v427 = vpack.c.b16 %v423, %v422
    %v433 = vsel %vm329, %v392, 0
    %435 = vmatprep.subr.bf16.mxu0 0
    %436 = vmatpush1.bf16.msra.mxu0 %v424
    %437 = vmatprep.subr.bf16.mxu0 0
    %438 = vmatpush1.bf16.msra.mxu0 %v425
    %439 = vmatprep.subr.bf16.mxu0 0
    %440 = vmatpush1.bf16.msra.mxu0 %v426
    %441 = vmatprep.subr.bf16.mxu0 0
    %442 = vmatpush1.bf16.msra.mxu0 %v427
    %443 = vmatprep.subr.bf16.mxu0 0
    %444 = vmatpush1.bf16.msra.mxu0 0
    %445 = vmatprep.subr.bf16.mxu0 0
    %446 = vmatpush1.bf16.msra.mxu0 0
    %447 = vmatprep.subr.bf16.mxu0 0
    %448 = vmatpush1.bf16.msra.mxu0 0
    %449 = vmatprep.subr.bf16.mxu0 0
    %450 = vmatpush1.bf16.msra.mxu0 0
    %451 = vmatprep.subr.bf16.mxu0 0
    %452 = vmatpush1.bf16.msra.mxu0 0
    %453 = vmatprep.subr.bf16.mxu0 0
    %454 = vmatpush1.bf16.msra.mxu0 0
    %455 = vmatprep.subr.bf16.mxu0 0
    %456 = vmatpush1.bf16.msra.mxu0 0
    %457 = vmatprep.subr.bf16.mxu0 0
    %458 = vmatpush1.bf16.msra.mxu0 0
    %459 = vmatprep.subr.bf16.mxu0 0
    %460 = vmatpush1.bf16.msra.mxu0 0
    %461 = vmatprep.subr.bf16.mxu0 0
    %462 = vmatpush1.bf16.msra.mxu0 0
    %463 = vmatprep.subr.bf16.mxu0 0
    %464 = vmatpush1.bf16.msra.mxu0 0
    %465 = vmatprep.subr.bf16.mxu0 0
    %466 = vmatpush1.bf16.msra.mxu0 0
    %467 = vmatprep.mubr.bf16.mxu0 0
    %468 = vmatmul.mubr.bf16.gmra.mrb[0].mxu0 %v433
    %v469 = vpop.f32.mrb[0].mxu0
    %v470 = vadd.f32 %v406, %v469
    %v471 = vpop.f32.mrb[0].mxu0
    %v472 = vpop.f32.mrb[0].mxu0
    %v473 = vpop.f32.mrb[0].mxu0
    %474 = vdwg.mxu0
    %v475 = vld [vmem:[%s11] sm:$0x1]
    %v476 = vld [vmem:[#allocation8] sm:$0x1]
    %v477 = vld [vmem:[%s13] sm:$0x1]
    %v478 = vld [vmem:[%s14] sm:$0x1]
    %v479 = vadd.f32 %v478, 1e-05
    %v480 = vrsqrt.pop %v479
    %v481 = vmul.f32 %v475, %v480
    %v483 = vlaneseq
    %v484 = vshrl.u32 %v483, 7
    %v485 = vsub.s32 0, %v484
    %v486 = vrot.slane %v481, %v485
    %v488 = vmul.f32 %v470, %v486
    %v489 = vmul.f32 %v477, %v481
    %v490 = vsub.f32 %v476, %v489
    %v492 = vlaneseq
    %v493 = vshrl.u32 %v492, 7
    %v494 = vsub.s32 0, %v493
    %v495 = vrot.slane %v490, %v494
    %v497 = vadd.f32 %v488, %v495
    %v498 = vmul.f32 %v497, 0.5
    %v499 = vmul.f32 %v497, 0.044715
    %v500 = vmul.f32 %v499, %v497
    %v501 = vmul.f32 %v500, %v497
    %v502 = vadd.f32 %v497, %v501
    %v503 = vmul.f32 %v502, 0.7978846
    %v504 = vtanh.pop %v503
    %v505 = vadd.f32 %v504, 1.0
    %v506 = vmul.f32 %v498, %v505
    %508 = vrot.lane.b32.xlu0 %v506, 86
    %v509 = vpop.permute.xlu0 %508
    %v511 = vmax.f32 %v506, %v509
    %v512 = vpack.c.bf16 %v511, %v511
    %v513 = vld [vmem:[%s15] sm:$0xf]
    %v514 = vld [vmem:[%s15 + $0x4] sm:$0xf]
    %v515 = vld [vmem:[%s15 + $0x8] sm:$0xf]
    %v516 = vld [vmem:[%s15 + $0xc] sm:$0xf]
    %v517 = vld [vmem:[%s15 + $0x10] sm:$0xf]
    %v518 = vld [vmem:[%s15 + $0x14] sm:$0x1]
    %v519 = vld [vmem:[#allocation10] sm:$0x1]
    %v521 = vlaneseq
    %v522 = vshrl.u32 %v521, 7
    %v523 = vsub.s32 0, %v522
    %v524 = vrot.slane %v519, %v523
    %v532 = vunpack.c.l.b16 %v513
    %v533 = vunpack.c.l.b16 %v514
    %v534 = vunpack.c.l.b16 %v515
    %v535 = vunpack.c.l.b16 %v516
    %v536 = vunpack.c.l.b16 %v517
    %v537 = vunpack.c.l.b16 %v518
    %v538 = vpack.c.b16 %v533, %v532
    %v539 = vpack.c.b16 %v535, %v534
    %v540 = vpack.c.b16 %v537, %v536
    %vm543 = vcmask 343040
    %v545 = vsel %vm543, %v512, 0
    %vm547 = vcmask 1044480
    %v549 = vsel %vm547, %v540, 0
    %551 = vmatprep.subr.bf16.mxu0 0
    %552 = vmatpush1.bf16.msra.mxu0 %v538
    %553 = vmatprep.subr.bf16.mxu0 0
    %554 = vmatpush1.bf16.msra.mxu0 %v539
    %555 = vmatprep.subr.bf16.mxu0 0
    %556 = vmatpush1.bf16.msra.mxu0 %v549
    %557 = vmatprep.subr.bf16.mxu0 0
    %558 = vmatpush1.bf16.msra.mxu0 0
    %559 = vmatprep.subr.bf16.mxu0 0
    %560 = vmatpush1.bf16.msra.mxu0 0
    %561 = vmatprep.subr.bf16.mxu0 0
    %562 = vmatpush1.bf16.msra.mxu0 0
    %563 = vmatprep.subr.bf16.mxu0 0
    %564 = vmatpush1.bf16.msra.mxu0 0
    %565 = vmatprep.subr.bf16.mxu0 0
    %566 = vmatpush1.bf16.msra.mxu0 0
    %567 = vmatprep.subr.bf16.mxu0 0
    %568 = vmatpush1.bf16.msra.mxu0 0
    %569 = vmatprep.subr.bf16.mxu0 0
    %570 = vmatpush1.bf16.msra.mxu0 0
    %571 = vmatprep.subr.bf16.mxu0 0
    %572 = vmatpush1.bf16.msra.mxu0 0
    %573 = vmatprep.subr.bf16.mxu0 0
    %574 = vmatpush1.bf16.msra.mxu0 0
    %575 = vmatprep.subr.bf16.mxu0 0
    %576 = vmatpush1.bf16.msra.mxu0 0
    %577 = vmatprep.subr.bf16.mxu0 0
    %578 = vmatpush1.bf16.msra.mxu0 0
    %579 = vmatprep.subr.bf16.mxu0 0
    %580 = vmatpush1.bf16.msra.mxu0 0
    %581 = vmatprep.subr.bf16.mxu0 0
    %582 = vmatpush1.bf16.msra.mxu0 0
    %583 = vmatprep.mubr.bf16.mxu0 0
    %584 = vmatmul.mubr.bf16.gmra.mrb[0].mxu0 %v545
    %v585 = vpop.f32.mrb[0].mxu0
    %v586 = vadd.f32 %v524, %v585
    %v587 = vpop.f32.mrb[0].mxu0
    %v588 = vpop.f32.mrb[0].mxu0
    %v589 = vpop.f32.mrb[0].mxu0
    %590 = vdwg.mxu0
    %v591 = vmul.f32 %v586, 0.5
    %v592 = vmul.f32 %v586, 0.044715
    %v593 = vmul.f32 %v592, %v586
    %v594 = vmul.f32 %v593, %v586
    %v595 = vadd.f32 %v586, %v594
    %v596 = vmul.f32 %v595, 0.7978846
    %v597 = vtanh.pop %v596
    %v598 = vadd.f32 %v597, 1.0
    %v599 = vmul.f32 %v591, %v598
    %v600 = vpack.c.bf16 %v599, %v599
    %v601 = vld [vmem:[%s17] sm:$0xf]
    %v602 = vld [vmem:[%s17 + $0x4] sm:$0xf]
    %v603 = vld [vmem:[%s17 + $0x8] sm:$0xf]
    %v604 = vld [vmem:[%s17 + $0xc] sm:$0xf]
    %v605 = vld [vmem:[%s17 + $0x10] sm:$0xf]
    %v606 = vld [vmem:[%s17 + $0x14] sm:$0x1]
    %v607 = vld [vmem:[#allocation11] sm:$0x1]
    %v609 = vlaneseq
    %v610 = vshrl.u32 %v609, 7
    %v611 = vsub.s32 0, %v610
    %v612 = vrot.slane %v607, %v611
    %v620 = vunpack.c.l.b16 %v601
    %v621 = vunpack.c.l.b16 %v602
    %v622 = vunpack.c.l.b16 %v603
    %v623 = vunpack.c.l.b16 %v604
    %v624 = vunpack.c.l.b16 %v605
    %v625 = vunpack.c.l.b16 %v606
    %v626 = vpack.c.b16 %v621, %v620
    %v627 = vpack.c.b16 %v623, %v622
    %v628 = vpack.c.b16 %v625, %v624
    %v632 = vsel %vm543, %v600, 0
    %v635 = vsel %vm547, %v628, 0
    %637 = vmatprep.subr.bf16.mxu0 0
    %638 = vmatpush1.bf16.msra.mxu0 %v626
    %639 = vmatprep.subr.bf16.mxu0 0
    %640 = vmatpush1.bf16.msra.mxu0 %v627
    %641 = vmatprep.subr.bf16.mxu0 0
    %642 = vmatpush1.bf16.msra.mxu0 %v635
    %643 = vmatprep.subr.bf16.mxu0 0
    %644 = vmatpush1.bf16.msra.mxu0 0
    %645 = vmatprep.subr.bf16.mxu0 0
    %646 = vmatpush1.bf16.msra.mxu0 0
    %647 = vmatprep.subr.bf16.mxu0 0
    %648 = vmatpush1.bf16.msra.mxu0 0
    %649 = vmatprep.subr.bf16.mxu0 0
    %650 = vmatpush1.bf16.msra.mxu0 0
    %651 = vmatprep.subr.bf16.mxu0 0
    %652 = vmatpush1.bf16.msra.mxu0 0
    %653 = vmatprep.subr.bf16.mxu0 0
    %654 = vmatpush1.bf16.msra.mxu0 0
    %655 = vmatprep.subr.bf16.mxu0 0
    %656 = vmatpush1.bf16.msra.mxu0 0
    %657 = vmatprep.subr.bf16.mxu0 0
    %658 = vmatpush1.bf16.msra.mxu0 0
    %659 = vmatprep.subr.bf16.mxu0 0
    %660 = vmatpush1.bf16.msra.mxu0 0
    %661 = vmatprep.subr.bf16.mxu0 0
    %662 = vmatpush1.bf16.msra.mxu0 0
    %663 = vmatprep.subr.bf16.mxu0 0
    %664 = vmatpush1.bf16.msra.mxu0 0
    %665 = vmatprep.subr.bf16.mxu0 0
    %666 = vmatpush1.bf16.msra.mxu0 0
    %667 = vmatprep.subr.bf16.mxu0 0
    %668 = vmatpush1.bf16.msra.mxu0 0
    %669 = vmatprep.mubr.bf16.mxu0 0
    %670 = vmatmul.mubr.bf16.gmra.mrb[0].mxu0 %v632
    %v671 = vpop.f32.mrb[0].mxu0
    %v672 = vadd.f32 %v612, %v671
    %v673 = vpop.f32.mrb[0].mxu0
    %v674 = vpop.f32.mrb[0].mxu0
    %v675 = vpop.f32.mrb[0].mxu0
    %676 = vdwg.mxu0
    %v677 = vmul.f32 %v672, 0.5
    %v678 = vmul.f32 %v672, 0.044715
    %v679 = vmul.f32 %v678, %v672
    %v680 = vmul.f32 %v679, %v672
    %v681 = vadd.f32 %v672, %v680
    %v682 = vmul.f32 %v681, 0.7978846
    %v683 = vtanh.pop %v682
    %v684 = vadd.f32 %v683, 1.0
    %v685 = vmul.f32 %v677, %v684
    %v686 = vpack.c.bf16 %v685, %v685
    %v687 = vld [vmem:[%s19] sm:$0xf]
    %v688 = vld [vmem:[%s19 + $0x4] sm:$0xf]
    %v689 = vld [vmem:[%s19 + $0x8] sm:$0xf]
    %v690 = vld [vmem:[%s19 + $0xc] sm:$0xf]
    %v691 = vld [vmem:[#allocation13] sm:$0x1]
    %v693 = vlaneseq
    %v694 = vshrl.u32 %v693, 7
    %v695 = vsub.s32 0, %v694
    %v696 = vrot.slane %v691, %v695
    %v702 = vunpack.c.l.b16 %v687
    %v703 = vunpack.c.l.b16 %v688
    %v704 = vunpack.c.l.b16 %v689
    %v705 = vunpack.c.l.b16 %v690
    %v706 = vpack.c.b16 %v703, %v702
    %v707 = vpack.c.b16 %v705, %v704
    %v711 = vsel %vm285, %v686, 0
    %713 = vmatprep.subr.bf16.mxu0 0
    %714 = vmatpush1.bf16.msra.mxu0 %v706
    %715 = vmatprep.subr.bf16.mxu0 0
    %716 = vmatpush1.bf16.msra.mxu0 %v707
    %717 = vmatprep.subr.bf16.mxu0 0
    %718 = vmatpush1.bf16.msra.mxu0 0
    %719 = vmatprep.subr.bf16.mxu0 0
    %720 = vmatpush1.bf16.msra.mxu0 0
    %721 = vmatprep.subr.bf16.mxu0 0
    %722 = vmatpush1.bf16.msra.mxu0 0
    %723 = vmatprep.subr.bf16.mxu0 0
    %724 = vmatpush1.bf16.msra.mxu0 0
    %725 = vmatprep.subr.bf16.mxu0 0
    %726 = vmatpush1.bf16.msra.mxu0 0
    %727 = vmatprep.subr.bf16.mxu0 0
    %728 = vmatpush1.bf16.msra.mxu0 0
    %729 = vmatprep.subr.bf16.mxu0 0
    %730 = vmatpush1.bf16.msra.mxu0 0
    %731 = vmatprep.subr.bf16.mxu0 0
    %732 = vmatpush1.bf16.msra.mxu0 0
    %733 = vmatprep.subr.bf16.mxu0 0
    %734 = vmatpush1.bf16.msra.mxu0 0
    %735 = vmatprep.subr.bf16.mxu0 0
    %736 = vmatpush1.bf16.msra.mxu0 0
    %737 = vmatprep.subr.bf16.mxu0 0
    %738 = vmatpush1.bf16.msra.mxu0 0
    %739 = vmatprep.subr.bf16.mxu0 0
    %740 = vmatpush1.bf16.msra.mxu0 0
    %741 = vmatprep.subr.bf16.mxu0 0
    %742 = vmatpush1.bf16.msra.mxu0 0
    %743 = vmatprep.subr.bf16.mxu0 0
    %744 = vmatpush1.bf16.msra.mxu0 0
    %745 = vmatprep.mubr.bf16.mxu0 0
    %746 = vmatmul.mubr.bf16.gmra.mrb[0].mxu0 %v711
    %v747 = vpop.f32.mrb[0].mxu0
    %v748 = vadd.f32 %v696, %v747
    %v749 = vpop.f32.mrb[0].mxu0
    %v750 = vpop.f32.mrb[0].mxu0
    %v751 = vpop.f32.mrb[0].mxu0
    %752 = vdwg.mxu0
    %v753 = vtanh.pop %v748
    %vm754 = vcmask 41984
    %755 = vst.msk [vmem:[#allocation14] sm:$0x3] %vm754, %v753
    // Predicated region
    $region114: #{forward.1} parent=1 // pred_check
      _
    $region115: #{forward.1} parent=1 // pred_check_branch
      %757 = sbr.rel (0) target = $region117
    $region116: #{forward.1} parent=1 // pred_region
      %s759 = ssub.s32 32, 32
      %760 = vsyncadd [#allocation4], %s759
      %s762 = sshll.u32 [#allocation14], 4
      %s763 = int_to_ptr.vmem [resolvable:$true] %s762
      %765 = dma.vmem_to_hbm [thread:$0]  %s763, 32, %s21, [#allocation4]
    $region117: #{forward.1} parent=1 // pred_fallthru
      _
    // Predicated region
    $region118: #{forward.1} parent=1 // pred_check
      _
    $region119: #{forward.1} parent=1 // pred_check_branch
      %767 = sbr.rel (0) target = $region121
    $region120: #{forward.1} parent=1 // pred_region
      %768 = dma.done [#allocation4], 32
    $region121: #{forward.1} parent=1 // pred_fallthru
      _
    %769 = vsyncpa [#allocation3], 1
    %770 = vsyncpa [#allocation6], 1
    %771 = vsyncpa [#allocation9], 1
    %772 = vsyncpa [#allocation12], 1
    %773 = vsyncpa [#allocation4], 1

</llo_original>
